<compile_context>
chip_gen: v7x
topology: tpu7x:2x2x1
jax: 0.10.0
libtpu: 0.0.40
codegen_flags: <defaults>
</compile_context>

<pallas_src>
import numpy as np
import jax
import jax.numpy as jnp
from jax.experimental import pallas as pl
from jax.experimental.pallas import tpu as pltpu


# ----------------------------------------------------------------------------
# Deterministic setup glue (numpy): gabor bank + coupling matrix, mirroring the
# reference implementation exactly.
# ----------------------------------------------------------------------------
def gabor(nsamp, Gpar):
    nsamp = int(nsamp)
    t = np.linspace(-2 * np.pi, 2 * np.pi, nsamp)
    x, y = np.meshgrid(t, t)
    pos = np.linspace(-2 * np.pi, 2 * np.pi, Gpar["Npos"])[
        Gpar["bounds"]: Gpar["Npos"] - Gpar["bounds"]]
    posx, posy = np.meshgrid(pos, pos)
    posx, posy = posx.ravel(), posy.ravel()
    orien = np.arange(0, np.pi, np.pi / Gpar["Norien"])
    gab, prop = [], []
    for pp in range(len(posx)):
        mu = [posx[pp], posy[pp]]
        for oo in range(Gpar["Norien"]):
            theta = orien[oo]
            xp = (x.ravel() - mu[0]) * np.cos(theta) + (y.ravel() - mu[1]) * np.sin(theta)
            yp = -(x.ravel() - mu[0]) * np.sin(theta) + (y.ravel() - mu[1]) * np.cos(theta)
            g = np.exp(-(xp ** 2 + yp ** 2) / (2 * Gpar["sig"] ** 2)) * np.cos(
                2 * np.pi * xp / Gpar["lam"])
            g[np.abs(g) < 0.1] = 0
            gab.append(g)
            prop.append([mu[0], mu[1], theta])
    return gab, prop


def coupling_matrix(gab_prop, Gpar_net):
    gab_prop = np.stack(gab_prop)
    pos = np.unique(gab_prop[:, 0])
    dpos = float(np.diff(pos[:2])[0])
    k1 = np.linspace(float(pos[0]) + dpos * Gpar_net["coupl_offset"],
                     float(pos[-1]) - dpos * Gpar_net["coupl_offset"],
                     Gpar_net["Npos"] - Gpar_net["coupl_redfact"])
    orien = np.unique(gab_prop[:, 2])
    dori = float(np.diff(orien[:2])[0])
    k2 = np.linspace(float(orien[0]) + dori * Gpar_net["coupl_offset"],
                     float(orien[-1]) - dori * Gpar_net["coupl_offset"],
                     Gpar_net["Norien"] - Gpar_net["coupl_redfact"])
    K = [k1, k1, k2]
    FILTER = []
    for pp in K[0]:
        for qq in K[1]:
            for oo in K[2]:
                fil = (np.exp(-(gab_prop[:, 0] - pp) ** 2 / (2 * Gpar_net["coupl_sigma"][0] ** 2))
                       * np.exp(-(gab_prop[:, 1] - qq) ** 2 / (2 * Gpar_net["coupl_sigma"][1] ** 2))
                       * np.exp(-(gab_prop[:, 2] - oo) ** 2 / (2 * Gpar_net["coupl_sigma"][2] ** 2)))
                FILTER.append(fil / np.sum(fil))
    FILTER = np.stack(FILTER)
    FILTER = FILTER / np.sum(FILTER, axis=0)
    return FILTER


# ----------------------------------------------------------------------------
# Pallas kernel: fused forward pass.  All operands are lane-padded to 128 and
# resident in VMEM; no grid / pipelining (per-step overhead would dominate at
# these shapes).
# ----------------------------------------------------------------------------
def mg_forward_kernel(x_ref, gab_ref, mod_ref, coup_ref, shift_ref,
                      w1_ref, b1_ref, wout_ref, bout_ref, out_ref):
    f32 = jnp.float32

    # encoding: act = inputs @ gab                                   (B, Np)
    act = jnp.dot(x_ref[...], gab_ref[...], preferred_element_type=f32)

    # MG_target modulation (multiplicative, nonlinearity_mod=False).
    # shift = -0.5*var(mod)*coupling**2 already folded in the wrapper.
    gmod = jnp.exp(mod_ref[...] * coup_ref[...] + shift_ref[...])    # (B, Np)
    act = jnp.maximum(act * gmod, 0.0)                               # ReLU

    # hidden layer (sparsity mask pre-applied to w1)                 (B, Hp)
    h = jnp.dot(act, w1_ref[...], preferred_element_type=f32) + b1_ref[...]
    h = jnp.maximum(h, 0.0)                                          # ReLU

    # output layer (gain folded into wout) + log-softmax over lane-padded
    # classes (pad lanes carry bias -1e30 -> exp underflows to exactly 0).
    logits = jnp.dot(h, wout_ref[...], preferred_element_type=f32) + bout_ref[...]
    m = jnp.max(logits, axis=-1, keepdims=True)
    lse = m + jnp.log(jnp.sum(jnp.exp(logits - m), axis=-1, keepdims=True))
    out_ref[...] = (logits - lse).astype(out_ref.dtype)


_LANE = 128


def _ceil_lane(n):
    return ((n + _LANE - 1) // _LANE) * _LANE


def mg_forward(x, gab, mod, mod_weight, FILTER, w1, b1, gain, wout, bout):
    if mod.shape[0] < 2:
        raise ValueError("MG_Model_multi forward needs batch > 1 (unbiased var of mod).")
    f32 = jnp.float32

    # -------- batch-independent pre-compute hoisted out of the kernel --------
    coupling = (mod_weight.astype(f32) ** 2) @ FILTER.astype(f32)      # (1, N)
    varmod = jnp.var(mod.astype(f32), ddof=1)                          # scalar, unbiased
    shift = -0.5 * varmod * coupling * coupling                        # (1, N)
    wout_scaled = wout * gain.reshape(-1, 1)                           # fold gain into Wout

    B = x.shape[0]
    N = gab.shape[1]
    H = w1.shape[1]
    C = wout.shape[1]
    Np, Hp, Cp = _ceil_lane(N), _ceil_lane(H), _ceil_lane(C)

    # -------- lane-dense padding (exact: zero pads / -1e30 output bias) ------
    gab_p   = jnp.pad(gab.astype(f32),        ((0, 0),      (0, Np - N)))
    coup_p  = jnp.pad(coupling,               ((0, 0),      (0, Np - N)))
    shift_p = jnp.pad(shift,                  ((0, 0),      (0, Np - N)))
    w1_p    = jnp.pad(w1.astype(f32),         ((0, Np - N), (0, Hp - H)))
    b1_p    = jnp.pad(b1.astype(f32),         ((0, 0),      (0, Hp - H)))
    wout_p  = jnp.pad(wout_scaled.astype(f32),((0, Hp - H), (0, Cp - C)))
    bout_p  = jnp.pad(bout.astype(f32),       ((0, 0),      (0, Cp - C)),
                      constant_values=-1e30)

    vmem = pl.BlockSpec(memory_space=pltpu.MemorySpace.VMEM)

    out_padded = pl.pallas_call(
        mg_forward_kernel,
        out_shape=jax.ShapeDtypeStruct((B, Cp), f32),
        in_specs=[vmem] * 9,
        out_specs=vmem,
    )(x.astype(f32), gab_p, mod.astype(f32), coup_p, shift_p,
      w1_p, b1_p, wout_p, bout_p)

    return out_padded[:, :C]


# Pure-JAX reference for validation (mirrors the PyTorch module).
def mg_forward_ref(x, gab, mod, mod_weight, FILTER, w1, b1, gain, wout, bout):
    act = x @ gab
    coupling = (mod_weight ** 2) @ FILTER
    varmod = jnp.var(mod, ddof=1)
    act = act * jnp.exp(mod @ coupling - varmod * coupling ** 2 / 2)
    act = jnp.maximum(act, 0.0)
    h = jnp.maximum(act @ w1 + b1, 0.0) * gain
    logits = h @ wout + bout
    return jax.nn.log_softmax(logits, axis=-1)


if __name__ == "__main__":
    # Small, module-consistent shapes.
    Gpar = {"Npos": 4, "bounds": 0, "Norien": 2, "sig": 1.0, "lam": 2.0,
            "coupl_offset": 0.5, "coupl_redfact": 1, "coupl_sigma": [1.0, 1.0, 1.0]}
    nsamp = 8
    I = nsamp * nsamp                       # 64 input pixels
    B = 8                                   # batch (must be > 1 for unbiased var)
    H = 32                                  # hidden width (mask[-1].shape[1])
    C = 10                                  # classes

    gab_list, gab_prop = gabor(nsamp, Gpar)
    gab_np = np.stack(gab_list).T.astype(np.float32)                 # (I, N)
    N = gab_np.shape[1]                                              # 4*4*2 = 32
    FILTER_np = coupling_matrix(gab_prop, Gpar).astype(np.float32)   # (NF, N), NF = 9

    key = jax.random.PRNGKey(0)
    k_x, k_mod, k_w1, k_b1, k_wo, k_bo, k_mask, k_gain = jax.random.split(key, 8)

    x = jax.random.normal(k_x, (B, I), dtype=jnp.float32)
    mod = jax.random.normal(k_mod, (B, 1), dtype=jnp.float32)

    gab = jnp.asarray(gab_np)
    FILTER = jnp.asarray(FILTER_np)
    mod_weight = jnp.ones((1, FILTER.shape[0]), dtype=jnp.float32)   # MG_target weight init

    # hidden Linear(N -> H): weight pre-transposed to (N, H), mask applied (applymask).
    mask = (jax.random.uniform(k_mask, (N, H)) > 0.2).astype(jnp.float32)
    w1 = (0.1 * jax.random.normal(k_w1, (N, H), dtype=jnp.float32)) * mask
    b1 = 0.1 * jax.random.normal(k_b1, (1, H), dtype=jnp.float32)
    # gain is ones at init in the module; use a non-trivial gain here to exercise the fold.
    gain = 1.0 + 0.1 * jax.random.normal(k_gain, (1, H), dtype=jnp.float32)

    # output Linear(H -> C): pre-transposed to (H, C).
    wout = 0.1 * jax.random.normal(k_wo, (H, C), dtype=jnp.float32)
    bout = 0.1 * jax.random.normal(k_bo, (1, C), dtype=jnp.float32)

    out = mg_forward(x, gab, mod, mod_weight, FILTER, w1, b1, gain, wout, bout)
    out = jax.block_until_ready(out)

    ref = mg_forward_ref(x, gab, mod, mod_weight, FILTER, w1, b1, gain, wout, bout)
    np.testing.assert_allclose(np.asarray(out), np.asarray(ref), rtol=1e-5, atol=1e-5)

    print("KERNEL_OK")
</pallas_src>

<mosaic_0001>
module attributes {stable_mosaic.version = 11 : i64} {
  func.func @mg_forward_kernel(%arg0: memref<8x64xf32, #tpu.memory_space<vmem>>, %arg1: memref<64x128xf32, #tpu.memory_space<vmem>>, %arg2: memref<8x1xf32, #tpu.memory_space<vmem>>, %arg3: memref<1x128xf32, #tpu.memory_space<vmem>>, %arg4: memref<1x128xf32, #tpu.memory_space<vmem>>, %arg5: memref<128x128xf32, #tpu.memory_space<vmem>>, %arg6: memref<1x128xf32, #tpu.memory_space<vmem>>, %arg7: memref<128x128xf32, #tpu.memory_space<vmem>>, %arg8: memref<1x128xf32, #tpu.memory_space<vmem>>, %arg9: memref<8x128xf32, #tpu.memory_space<vmem>>) attributes {dimension_semantics = [], scalar_prefetch = 0 : i64, scratch_operands = 0 : i64, tpu.core_type = #tpu.core_type<tc>} {
    %c0 = arith.constant 0 : index
    %c0_0 = arith.constant 0 : index
    %0 = vector.load %arg0[%c0, %c0_0] : memref<8x64xf32, #tpu.memory_space<vmem>>, vector<8x64xf32>
    %c0_1 = arith.constant 0 : index
    %c0_2 = arith.constant 0 : index
    %1 = vector.load %arg1[%c0_1, %c0_2] : memref<64x128xf32, #tpu.memory_space<vmem>>, vector<64x128xf32>
    %cst = arith.constant dense<0.000000e+00> : vector<8x128xf32>
    %2 = tpu.matmul %0, %1, %cst {dimension_numbers = #tpu.dot_dimension_numbers<[1], [0], [0], [1], [0, 0, 1, 1], [], []>} : vector<8x64xf32>, vector<64x128xf32>, vector<8x128xf32> -> vector<8x128xf32>
    %c0_3 = arith.constant 0 : index
    %c0_4 = arith.constant 0 : index
    %3 = vector.load %arg2[%c0_3, %c0_4] : memref<8x1xf32, #tpu.memory_space<vmem>>, vector<8x1xf32>
    %c0_5 = arith.constant 0 : index
    %c0_6 = arith.constant 0 : index
    %4 = vector.load %arg3[%c0_5, %c0_6] : memref<1x128xf32, #tpu.memory_space<vmem>>, vector<1x128xf32>
    %5 = vector.broadcast %3 : vector<8x1xf32> to vector<8x128xf32>
    %6 = vector.broadcast %4 : vector<1x128xf32> to vector<8x128xf32>
    %7 = arith.mulf %5, %6 : vector<8x128xf32>
    %c0_7 = arith.constant 0 : index
    %c0_8 = arith.constant 0 : index
    %8 = vector.load %arg4[%c0_7, %c0_8] : memref<1x128xf32, #tpu.memory_space<vmem>>, vector<1x128xf32>
    %9 = vector.broadcast %8 : vector<1x128xf32> to vector<8x128xf32>
    %10 = arith.addf %7, %9 : vector<8x128xf32>
    %11 = math.exp %10 : vector<8x128xf32>
    %12 = arith.mulf %2, %11 : vector<8x128xf32>
    %cst_9 = arith.constant 0.000000e+00 : f32
    %13 = vector.broadcast %cst_9 : f32 to vector<8x128xf32>
    %14 = arith.maximumf %12, %13 : vector<8x128xf32>
    %c0_10 = arith.constant 0 : index
    %c0_11 = arith.constant 0 : index
    %15 = vector.load %arg5[%c0_10, %c0_11] : memref<128x128xf32, #tpu.memory_space<vmem>>, vector<128x128xf32>
    %cst_12 = arith.constant dense<0.000000e+00> : vector<8x128xf32>
    %16 = tpu.matmul %14, %15, %cst_12 {dimension_numbers = #tpu.dot_dimension_numbers<[1], [0], [0], [1], [0, 0, 1, 1], [], []>} : vector<8x128xf32>, vector<128x128xf32>, vector<8x128xf32> -> vector<8x128xf32>
    %c0_13 = arith.constant 0 : index
    %c0_14 = arith.constant 0 : index
    %17 = vector.load %arg6[%c0_13, %c0_14] : memref<1x128xf32, #tpu.memory_space<vmem>>, vector<1x128xf32>
    %18 = vector.broadcast %17 : vector<1x128xf32> to vector<8x128xf32>
    %19 = arith.addf %16, %18 : vector<8x128xf32>
    %cst_15 = arith.constant 0.000000e+00 : f32
    %20 = vector.broadcast %cst_15 : f32 to vector<8x128xf32>
    %21 = arith.maximumf %19, %20 : vector<8x128xf32>
    %c0_16 = arith.constant 0 : index
    %c0_17 = arith.constant 0 : index
    %22 = vector.load %arg7[%c0_16, %c0_17] : memref<128x128xf32, #tpu.memory_space<vmem>>, vector<128x128xf32>
    %cst_18 = arith.constant dense<0.000000e+00> : vector<8x128xf32>
    %23 = tpu.matmul %21, %22, %cst_18 {dimension_numbers = #tpu.dot_dimension_numbers<[1], [0], [0], [1], [0, 0, 1, 1], [], []>} : vector<8x128xf32>, vector<128x128xf32>, vector<8x128xf32> -> vector<8x128xf32>
    %c0_19 = arith.constant 0 : index
    %c0_20 = arith.constant 0 : index
    %24 = vector.load %arg8[%c0_19, %c0_20] : memref<1x128xf32, #tpu.memory_space<vmem>>, vector<1x128xf32>
    %25 = vector.broadcast %24 : vector<1x128xf32> to vector<8x128xf32>
    %26 = arith.addf %23, %25 : vector<8x128xf32>
    %cst_21 = arith.constant dense<0xFF800000> : vector<8xf32>
    %27 = vector.multi_reduction <maximumf>, %26, %cst_21 [1] : vector<8x128xf32> to vector<8xf32>
    %28 = vector.shape_cast %27 : vector<8xf32> to vector<8x1xf32>
    %29 = vector.broadcast %28 : vector<8x1xf32> to vector<8x128xf32>
    %30 = arith.subf %26, %29 : vector<8x128xf32>
    %31 = math.exp %30 : vector<8x128xf32>
    %cst_22 = arith.constant dense<0.000000e+00> : vector<8xf32>
    %32 = vector.multi_reduction <add>, %31, %cst_22 [1] : vector<8x128xf32> to vector<8xf32>
    %33 = vector.shape_cast %32 : vector<8xf32> to vector<8x1xf32>
    %34 = math.log %33 : vector<8x1xf32>
    %35 = arith.addf %28, %34 : vector<8x1xf32>
    %36 = vector.broadcast %35 : vector<8x1xf32> to vector<8x128xf32>
    %37 = arith.subf %26, %36 : vector<8x128xf32>
    %c0_23 = arith.constant 0 : index
    %c0_24 = arith.constant 0 : index
    %38 = vector.load %arg9[%c0_23, %c0_24] : memref<8x128xf32, #tpu.memory_space<vmem>>, vector<8x128xf32>
    tpu.vector_store %arg9[%c0_23, %c0_24], %37 {strides = array<i32>} : memref<8x128xf32, #tpu.memory_space<vmem>>, vector<8x128xf32>,
    return
  }
}

</mosaic_0001>

<llo_original>
// kernel: tpu_custom_call.1
$region0: #{tpu_custom_call.1}
  #allocation0 [shape = 'u32[]', space=smem, size = 0x4, offset = 0x4, fixed_abs, tag = 'smem constant byte address 0x4 - core index']
  #allocation1 [shape = 'u32[144,128]{1,0:T(1,128)}', space=vmem, size = 0x12000, scoped, tag = 'internal scratch']
  %s0 = inlined_call_operand.vmem [shape: f32[8,64], index: 0, kind: input, shape index: {}]
  %s1 = inlined_call_operand.hbm [shape: f32[64,128], index: 1, kind: input, shape index: {}]
  %s2 = inlined_call_operand.vmem [shape: f32[8,1], index: 2, kind: input, shape index: {}]
  %s3 = inlined_call_operand.vmem [shape: f32[1,128], index: 3, kind: input, shape index: {}]
  %s4 = inlined_call_operand.vmem [shape: f32[1,128], index: 4, kind: input, shape index: {}]
  %s5 = inlined_call_operand.hbm [shape: f32[128,128], index: 5, kind: input, shape index: {}]
  %s6 = inlined_call_operand.vmem [shape: f32[1,128], index: 6, kind: input, shape index: {}]
  %s7 = inlined_call_operand.hbm [shape: f32[128,128], index: 7, kind: input, shape index: {}]
  %s8 = inlined_call_operand.vmem [shape: f32[1,128], index: 8, kind: input, shape index: {}]
  %s9 = inlined_call_operand.hbm [shape: f32[8,128], index: 9, kind: output, shape index: {}]
  %s10 = sld [smem:[#allocation0]]
  $region58: #{tpu_custom_call.1} parent=0
    _
  %s12 = ssub.s32 1, %s10
  %s13 = scalar_select 0, %s12, %s10
  $region1: #{tpu_custom_call.1} parent=0
    #allocation2 [shape = 'u8[32768]{0}', space=vmem, size = 0x8000, scoped, tag = 'input window, operand 1, single buffered']
    #allocation3 [shape = 's32[1]{0}', space=sflag, size = 0x4, scoped, tag = 'scoped memory for tpu_custom_call.1']
    #allocation4 [shape = 's32[1]{0}', space=sflag, size = 0x4, scoped, tag = 'scoped memory for tpu_custom_call.1']
    #allocation5 [shape = 'u8[65536]{0}', space=vmem, size = 0x10000, scoped, tag = 'input window, operand 5, single buffered']
    #allocation6 [shape = 's32[1]{0}', space=sflag, size = 0x4, scoped, tag = 'scoped memory for tpu_custom_call.1']
    #allocation7 [shape = 'u8[65536]{0}', space=vmem, size = 0x10000, scoped, tag = 'input window, operand 7, single buffered']
    #allocation8 [shape = 'u8[4096]{0}', space=vmem, size = 0x1000, scoped, tag = 'output window, operand 0, single buffered']
    %14 = vsyncpa [#allocation3], 0
    %15 = vsyncpa [#allocation6], 0
    %16 = vsyncpa [#allocation4], 0
    // Predicated region
    $region2: #{tpu_custom_call.1} parent=1 // pred_check
      _
    $region3: #{tpu_custom_call.1} parent=1 // pred_check_branch
      %18 = sbr.rel (0) target = $region5
    $region4: #{tpu_custom_call.1} parent=1 // pred_region
      _
    $region5: #{tpu_custom_call.1} parent=1 // pred_fallthru
      _
    // Predicated region
    $region6: #{tpu_custom_call.1} parent=1 // pred_check
      _
    $region7: #{tpu_custom_call.1} parent=1 // pred_check_branch
      %20 = sbr.rel (0) target = $region9
    $region8: #{tpu_custom_call.1} parent=1 // pred_region
      %s22 = ssub.s32 1024, 1024
      %23 = vsyncadd [#allocation3], %s22
      %s24 = sshll.u32 [#allocation2], 4
      %s25 = int_to_ptr.vmem [resolvable:$true] %s24
      %30 = dma.hbm_to_vmem [thread:$0]  %s1, 1024, %s25, [#allocation3], 128, 128, 8
    $region9: #{tpu_custom_call.1} parent=1 // pred_fallthru
      _
    // Predicated region
    $region10: #{tpu_custom_call.1} parent=1 // pred_check
      _
    $region11: #{tpu_custom_call.1} parent=1 // pred_check_branch
      %32 = sbr.rel (0) target = $region13
    $region12: #{tpu_custom_call.1} parent=1 // pred_region
      _
    $region13: #{tpu_custom_call.1} parent=1 // pred_fallthru
      _
    // Predicated region
    $region14: #{tpu_custom_call.1} parent=1 // pred_check
      _
    $region15: #{tpu_custom_call.1} parent=1 // pred_check_branch
      %34 = sbr.rel (0) target = $region17
    $region16: #{tpu_custom_call.1} parent=1 // pred_region
      _
    $region17: #{tpu_custom_call.1} parent=1 // pred_fallthru
      _
    // Predicated region
    $region18: #{tpu_custom_call.1} parent=1 // pred_check
      _
    $region19: #{tpu_custom_call.1} parent=1 // pred_check_branch
      %36 = sbr.rel (0) target = $region21
    $region20: #{tpu_custom_call.1} parent=1 // pred_region
      _
    $region21: #{tpu_custom_call.1} parent=1 // pred_fallthru
      _
    // Predicated region
    $region22: #{tpu_custom_call.1} parent=1 // pred_check
      _
    $region23: #{tpu_custom_call.1} parent=1 // pred_check_branch
      %38 = sbr.rel (0) target = $region25
    $region24: #{tpu_custom_call.1} parent=1 // pred_region
      %s40 = ssub.s32 2048, 2048
      %41 = vsyncadd [#allocation6], %s40
      %s42 = sshll.u32 [#allocation5], 4
      %s43 = int_to_ptr.vmem [resolvable:$true] %s42
      %48 = dma.hbm_to_vmem [thread:$0]  %s5, 2048, %s43, [#allocation6], 128, 128, 8
    $region25: #{tpu_custom_call.1} parent=1 // pred_fallthru
      _
    // Predicated region
    $region26: #{tpu_custom_call.1} parent=1 // pred_check
      _
    $region27: #{tpu_custom_call.1} parent=1 // pred_check_branch
      %50 = sbr.rel (0) target = $region29
    $region28: #{tpu_custom_call.1} parent=1 // pred_region
      _
    $region29: #{tpu_custom_call.1} parent=1 // pred_fallthru
      _
    // Predicated region
    $region30: #{tpu_custom_call.1} parent=1 // pred_check
      _
    $region31: #{tpu_custom_call.1} parent=1 // pred_check_branch
      %52 = sbr.rel (0) target = $region33
    $region32: #{tpu_custom_call.1} parent=1 // pred_region
      %s54 = ssub.s32 2048, 2048
      %55 = vsyncadd [#allocation6], %s54
      %s56 = sshll.u32 [#allocation7], 4
      %s57 = int_to_ptr.vmem [resolvable:$true] %s56
      %62 = dma.hbm_to_vmem [thread:$0]  %s7, 2048, %s57, [#allocation6], 128, 128, 8
    $region33: #{tpu_custom_call.1} parent=1 // pred_fallthru
      _
    // Predicated region
    $region34: #{tpu_custom_call.1} parent=1 // pred_check
      _
    $region35: #{tpu_custom_call.1} parent=1 // pred_check_branch
      %64 = sbr.rel (0) target = $region37
    $region36: #{tpu_custom_call.1} parent=1 // pred_region
      _
    $region37: #{tpu_custom_call.1} parent=1 // pred_fallthru
      _
    // Predicated region
    $region38: #{tpu_custom_call.1} parent=1 // pred_check
      _
    $region39: #{tpu_custom_call.1} parent=1 // pred_check_branch
      %66 = sbr.rel (0) target = $region41
    $region40: #{tpu_custom_call.1} parent=1 // pred_region
      %67 = dma.done [#allocation3], 1024
    $region41: #{tpu_custom_call.1} parent=1 // pred_fallthru
      _
    // Predicated region
    $region42: #{tpu_custom_call.1} parent=1 // pred_check
      _
    $region43: #{tpu_custom_call.1} parent=1 // pred_check_branch
      %69 = sbr.rel (0) target = $region45
    $region44: #{tpu_custom_call.1} parent=1 // pred_region
      %70 = dma.done [#allocation6], 2048
    $region45: #{tpu_custom_call.1} parent=1 // pred_fallthru
      _
    // Predicated region
    $region46: #{tpu_custom_call.1} parent=1 // pred_check
      _
    $region47: #{tpu_custom_call.1} parent=1 // pred_check_branch
      %72 = sbr.rel (0) target = $region49
    $region48: #{tpu_custom_call.1} parent=1 // pred_region
      %73 = dma.done [#allocation6], 2048
    $region49: #{tpu_custom_call.1} parent=1 // pred_fallthru
      _
    %v74 = vld [vmem:[%s0] sm:$0xff]
    %v75 = vld [vmem:[#allocation2] sm:$0xff]
    %v76 = vld [vmem:[#allocation2 + $0x8] sm:$0xff]
    %v77 = vld [vmem:[#allocation2 + $0x10] sm:$0xff]
    %v78 = vld [vmem:[#allocation2 + $0x18] sm:$0xff]
    %v79 = vld [vmem:[#allocation2 + $0x20] sm:$0xff]
    %v80 = vld [vmem:[#allocation2 + $0x28] sm:$0xff]
    %v81 = vld [vmem:[#allocation2 + $0x30] sm:$0xff]
    %v82 = vld [vmem:[#allocation2 + $0x38] sm:$0xff]
    %vm83 = vcmask 523264
    %v85 = vsel %vm83, %v74, 0
    %87 = vmatprep.subr.mxu0 0.0
    %88 = vmatpush1.msra.mxu0 %v75
    %89 = vmatprep.subr.mxu0 0.0
    %90 = vmatpush1.msra.mxu0 %v76
    %91 = vmatprep.subr.mxu0 0.0
    %92 = vmatpush1.msra.mxu0 %v77
    %93 = vmatprep.subr.mxu0 0.0
    %94 = vmatpush1.msra.mxu0 %v78
    %95 = vmatprep.subr.mxu0 0.0
    %96 = vmatpush1.msra.mxu0 %v79
    %97 = vmatprep.subr.mxu0 0.0
    %98 = vmatpush1.msra.mxu0 %v80
    %99 = vmatprep.subr.mxu0 0.0
    %100 = vmatpush1.msra.mxu0 %v81
    %101 = vmatprep.subr.mxu0 0.0
    %102 = vmatpush1.msra.mxu0 %v82
    %103 = vmatprep.subr.mxu0 0.0
    %104 = vmatpush1.msra.mxu0 0.0
    %105 = vmatprep.subr.mxu0 0.0
    %106 = vmatpush1.msra.mxu0 0.0
    %107 = vmatprep.subr.mxu0 0.0
    %108 = vmatpush1.msra.mxu0 0.0
    %109 = vmatprep.subr.mxu0 0.0
    %110 = vmatpush1.msra.mxu0 0.0
    %111 = vmatprep.subr.mxu0 0.0
    %112 = vmatpush1.msra.mxu0 0.0
    %113 = vmatprep.subr.mxu0 0.0
    %114 = vmatpush1.msra.mxu0 0.0
    %115 = vmatprep.subr.mxu0 0.0
    %116 = vmatpush1.msra.mxu0 0.0
    %117 = vmatprep.subr.mxu0 0.0
    %118 = vmatpush1.msra.mxu0 0.0
    %119 = vmatprep.subr.mxu0 0.0
    %120 = vmatpush1.msra.mxu0 0.0
    %121 = vmatprep.subr.mxu0 0.0
    %122 = vmatpush1.msra.mxu0 0.0
    %123 = vmatprep.subr.mxu0 0.0
    %124 = vmatpush1.msra.mxu0 0.0
    %125 = vmatprep.subr.mxu0 0.0
    %126 = vmatpush1.msra.mxu0 0.0
    %127 = vmatprep.subr.mxu0 0.0
    %128 = vmatpush1.msra.mxu0 0.0
    %129 = vmatprep.subr.mxu0 0.0
    %130 = vmatpush1.msra.mxu0 0.0
    %131 = vmatprep.subr.mxu0 0.0
    %132 = vmatpush1.msra.mxu0 0.0
    %133 = vmatprep.subr.mxu0 0.0
    %134 = vmatpush1.msra.mxu0 0.0
    %135 = vmatprep.subr.mxu0 0.0
    %136 = vmatpush1.msra.mxu0 0.0
    %137 = vmatprep.subr.mxu0 0.0
    %138 = vmatpush1.msra.mxu0 0.0
    %139 = vmatprep.subr.mxu0 0.0
    %140 = vmatpush1.msra.mxu0 0.0
    %141 = vmatprep.subr.mxu0 0.0
    %142 = vmatpush1.msra.mxu0 0.0
    %143 = vmatprep.subr.mxu0 0.0
    %144 = vmatpush1.msra.mxu0 0.0
    %145 = vmatprep.subr.mxu0 0.0
    %146 = vmatpush1.msra.mxu0 0.0
    %147 = vmatprep.subr.mxu0 0.0
    %148 = vmatpush1.msra.mxu0 0.0
    %149 = vmatprep.subr.mxu0 0.0
    %150 = vmatpush1.msra.mxu0 0.0
    %151 = vmatprep.mubr.f32.mxu0 0.0
    %152 = vmatmul.mubr.f32.gmra.mrb[0].mxu0 %v85
    %v153 = vpop.f32.mrb[0].mxu0
    %v154 = vadd.f32 0.0, %v153
    %v155 = vpop.f32.mrb[0].mxu0
    %156 = vdwg.mxu0
    %v157 = vld [vmem:[%s2] sm:$0xff]
    %v158 = vld [vmem:[%s3] sm:$0x1]
    %160 = vset.pattern.permute.xlu0 0
    %161 = vperm.xlu0 %160, %v157
    %v162 = vpop.permute.xlu0 %161
    %v165 = vlaneseq
    %v166 = vshrl.u32 %v165, 7
    %v167 = vsub.s32 0, %v166
    %v168 = vrot.slane %v158, %v167
    %v170 = vmul.f32 %v162, %v168
    %v171 = vld [vmem:[%s4] sm:$0x1]
    %v173 = vlaneseq
    %v174 = vshrl.u32 %v173, 7
    %v175 = vsub.s32 0, %v174
    %v176 = vrot.slane %v171, %v175
    %v178 = vadd.f32 %v170, %v176
    %v179 = vmul.f32 %v178, 1.442695
    %v180 = vpow.pop %v179
    %v181 = vmul.f32 %v154, %v180
    %v182 = vmax.f32 %v181, 0.0
    %v183 = vld [vmem:[#allocation5] sm:$0xff]
    %v184 = vld [vmem:[#allocation5 + $0x8] sm:$0xff]
    %v185 = vld [vmem:[#allocation5 + $0x10] sm:$0xff]
    %v186 = vld [vmem:[#allocation5 + $0x18] sm:$0xff]
    %v187 = vld [vmem:[#allocation5 + $0x20] sm:$0xff]
    %v188 = vld [vmem:[#allocation5 + $0x28] sm:$0xff]
    %v189 = vld [vmem:[#allocation5 + $0x30] sm:$0xff]
    %v190 = vld [vmem:[#allocation5 + $0x38] sm:$0xff]
    %v191 = vld [vmem:[#allocation5 + $0x40] sm:$0xff]
    %v192 = vld [vmem:[#allocation5 + $0x48] sm:$0xff]
    %v193 = vld [vmem:[#allocation5 + $0x50] sm:$0xff]
    %v194 = vld [vmem:[#allocation5 + $0x58] sm:$0xff]
    %v195 = vld [vmem:[#allocation5 + $0x60] sm:$0xff]
    %v196 = vld [vmem:[#allocation5 + $0x68] sm:$0xff]
    %v197 = vld [vmem:[#allocation5 + $0x70] sm:$0xff]
    %v198 = vld [vmem:[#allocation5 + $0x78] sm:$0xff]
    %v199 = vld [vmem:[%s6] sm:$0x1]
    %v201 = vlaneseq
    %v202 = vshrl.u32 %v201, 7
    %v203 = vsub.s32 0, %v202
    %v204 = vrot.slane %v199, %v203
    %206 = vmatprep.subr.mxu0 0.0
    %207 = vmatpush1.msra.mxu0 %v183
    %208 = vmatprep.subr.mxu0 0.0
    %209 = vmatpush1.msra.mxu0 %v184
    %210 = vmatprep.subr.mxu0 0.0
    %211 = vmatpush1.msra.mxu0 %v185
    %212 = vmatprep.subr.mxu0 0.0
    %213 = vmatpush1.msra.mxu0 %v186
    %214 = vmatprep.subr.mxu0 0.0
    %215 = vmatpush1.msra.mxu0 %v187
    %216 = vmatprep.subr.mxu0 0.0
    %217 = vmatpush1.msra.mxu0 %v188
    %218 = vmatprep.subr.mxu0 0.0
    %219 = vmatpush1.msra.mxu0 %v189
    %220 = vmatprep.subr.mxu0 0.0
    %221 = vmatpush1.msra.mxu0 %v190
    %222 = vmatprep.subr.mxu0 0.0
    %223 = vmatpush1.msra.mxu0 %v191
    %224 = vmatprep.subr.mxu0 0.0
    %225 = vmatpush1.msra.mxu0 %v192
    %226 = vmatprep.subr.mxu0 0.0
    %227 = vmatpush1.msra.mxu0 %v193
    %228 = vmatprep.subr.mxu0 0.0
    %229 = vmatpush1.msra.mxu0 %v194
    %230 = vmatprep.subr.mxu0 0.0
    %231 = vmatpush1.msra.mxu0 %v195
    %232 = vmatprep.subr.mxu0 0.0
    %233 = vmatpush1.msra.mxu0 %v196
    %234 = vmatprep.subr.mxu0 0.0
    %235 = vmatpush1.msra.mxu0 %v197
    %236 = vmatprep.subr.mxu0 0.0
    %237 = vmatpush1.msra.mxu0 %v198
    %238 = vmatprep.subr.mxu0 0.0
    %239 = vmatpush1.msra.mxu0 0.0
    %240 = vmatprep.subr.mxu0 0.0
    %241 = vmatpush1.msra.mxu0 0.0
    %242 = vmatprep.subr.mxu0 0.0
    %243 = vmatpush1.msra.mxu0 0.0
    %244 = vmatprep.subr.mxu0 0.0
    %245 = vmatpush1.msra.mxu0 0.0
    %246 = vmatprep.subr.mxu0 0.0
    %247 = vmatpush1.msra.mxu0 0.0
    %248 = vmatprep.subr.mxu0 0.0
    %249 = vmatpush1.msra.mxu0 0.0
    %250 = vmatprep.subr.mxu0 0.0
    %251 = vmatpush1.msra.mxu0 0.0
    %252 = vmatprep.subr.mxu0 0.0
    %253 = vmatpush1.msra.mxu0 0.0
    %254 = vmatprep.subr.mxu0 0.0
    %255 = vmatpush1.msra.mxu0 0.0
    %256 = vmatprep.subr.mxu0 0.0
    %257 = vmatpush1.msra.mxu0 0.0
    %258 = vmatprep.subr.mxu0 0.0
    %259 = vmatpush1.msra.mxu0 0.0
    %260 = vmatprep.subr.mxu0 0.0
    %261 = vmatpush1.msra.mxu0 0.0
    %262 = vmatprep.subr.mxu0 0.0
    %263 = vmatpush1.msra.mxu0 0.0
    %264 = vmatprep.subr.mxu0 0.0
    %265 = vmatpush1.msra.mxu0 0.0
    %266 = vmatprep.subr.mxu0 0.0
    %267 = vmatpush1.msra.mxu0 0.0
    %268 = vmatprep.subr.mxu0 0.0
    %269 = vmatpush1.msra.mxu0 0.0
    %270 = vmatprep.mubr.f32.mxu0 0.0
    %271 = vmatmul.mubr.f32.gmra.mrb[0].mxu0 %v182
    %v272 = vpop.f32.mrb[0].mxu0
    %v273 = vadd.f32 %v204, %v272
    %v274 = vpop.f32.mrb[0].mxu0
    %275 = vdwg.mxu0
    %v276 = vmax.f32 %v273, 0.0
    %v277 = vld [vmem:[#allocation7] sm:$0xff]
    %v278 = vld [vmem:[#allocation7 + $0x8] sm:$0xff]
    %v279 = vld [vmem:[#allocation7 + $0x10] sm:$0xff]
    %v280 = vld [vmem:[#allocation7 + $0x18] sm:$0xff]
    %v281 = vld [vmem:[#allocation7 + $0x20] sm:$0xff]
    %v282 = vld [vmem:[#allocation7 + $0x28] sm:$0xff]
    %v283 = vld [vmem:[#allocation7 + $0x30] sm:$0xff]
    %v284 = vld [vmem:[#allocation7 + $0x38] sm:$0xff]
    %v285 = vld [vmem:[#allocation7 + $0x40] sm:$0xff]
    %v286 = vld [vmem:[#allocation7 + $0x48] sm:$0xff]
    %v287 = vld [vmem:[#allocation7 + $0x50] sm:$0xff]
    %v288 = vld [vmem:[#allocation7 + $0x58] sm:$0xff]
    %v289 = vld [vmem:[#allocation7 + $0x60] sm:$0xff]
    %v290 = vld [vmem:[#allocation7 + $0x68] sm:$0xff]
    %v291 = vld [vmem:[#allocation7 + $0x70] sm:$0xff]
    %v292 = vld [vmem:[#allocation7 + $0x78] sm:$0xff]
    %v293 = vld [vmem:[%s8] sm:$0x1]
    %v295 = vlaneseq
    %v296 = vshrl.u32 %v295, 7
    %v297 = vsub.s32 0, %v296
    %v298 = vrot.slane %v293, %v297
    %300 = vmatprep.subr.mxu0 0.0
    %301 = vmatpush1.msra.mxu0 %v277
    %302 = vmatprep.subr.mxu0 0.0
    %303 = vmatpush1.msra.mxu0 %v278
    %304 = vmatprep.subr.mxu0 0.0
    %305 = vmatpush1.msra.mxu0 %v279
    %306 = vmatprep.subr.mxu0 0.0
    %307 = vmatpush1.msra.mxu0 %v280
    %308 = vmatprep.subr.mxu0 0.0
    %309 = vmatpush1.msra.mxu0 %v281
    %310 = vmatprep.subr.mxu0 0.0
    %311 = vmatpush1.msra.mxu0 %v282
    %312 = vmatprep.subr.mxu0 0.0
    %313 = vmatpush1.msra.mxu0 %v283
    %314 = vmatprep.subr.mxu0 0.0
    %315 = vmatpush1.msra.mxu0 %v284
    %316 = vmatprep.subr.mxu0 0.0
    %317 = vmatpush1.msra.mxu0 %v285
    %318 = vmatprep.subr.mxu0 0.0
    %319 = vmatpush1.msra.mxu0 %v286
    %320 = vmatprep.subr.mxu0 0.0
    %321 = vmatpush1.msra.mxu0 %v287
    %322 = vmatprep.subr.mxu0 0.0
    %323 = vmatpush1.msra.mxu0 %v288
    %324 = vmatprep.subr.mxu0 0.0
    %325 = vmatpush1.msra.mxu0 %v289
    %326 = vmatprep.subr.mxu0 0.0
    %327 = vmatpush1.msra.mxu0 %v290
    %328 = vmatprep.subr.mxu0 0.0
    %329 = vmatpush1.msra.mxu0 %v291
    %330 = vmatprep.subr.mxu0 0.0
    %331 = vmatpush1.msra.mxu0 %v292
    %332 = vmatprep.subr.mxu0 0.0
    %333 = vmatpush1.msra.mxu0 0.0
    %334 = vmatprep.subr.mxu0 0.0
    %335 = vmatpush1.msra.mxu0 0.0
    %336 = vmatprep.subr.mxu0 0.0
    %337 = vmatpush1.msra.mxu0 0.0
    %338 = vmatprep.subr.mxu0 0.0
    %339 = vmatpush1.msra.mxu0 0.0
    %340 = vmatprep.subr.mxu0 0.0
    %341 = vmatpush1.msra.mxu0 0.0
    %342 = vmatprep.subr.mxu0 0.0
    %343 = vmatpush1.msra.mxu0 0.0
    %344 = vmatprep.subr.mxu0 0.0
    %345 = vmatpush1.msra.mxu0 0.0
    %346 = vmatprep.subr.mxu0 0.0
    %347 = vmatpush1.msra.mxu0 0.0
    %348 = vmatprep.subr.mxu0 0.0
    %349 = vmatpush1.msra.mxu0 0.0
    %350 = vmatprep.subr.mxu0 0.0
    %351 = vmatpush1.msra.mxu0 0.0
    %352 = vmatprep.subr.mxu0 0.0
    %353 = vmatpush1.msra.mxu0 0.0
    %354 = vmatprep.subr.mxu0 0.0
    %355 = vmatpush1.msra.mxu0 0.0
    %356 = vmatprep.subr.mxu0 0.0
    %357 = vmatpush1.msra.mxu0 0.0
    %358 = vmatprep.subr.mxu0 0.0
    %359 = vmatpush1.msra.mxu0 0.0
    %360 = vmatprep.subr.mxu0 0.0
    %361 = vmatpush1.msra.mxu0 0.0
    %362 = vmatprep.subr.mxu0 0.0
    %363 = vmatpush1.msra.mxu0 0.0
    %364 = vmatprep.mubr.f32.mxu0 0.0
    %365 = vmatmul.mubr.f32.gmra.mrb[0].mxu0 %v276
    %v366 = vpop.f32.mrb[0].mxu0
    %v367 = vadd.f32 %v298, %v366
    %v368 = vpop.f32.mrb[0].mxu0
    %369 = vdwg.mxu0
    %370 = vmax.xlane.f32.xlu0 %v367
    %v371 = vpop.xlane.xlu0 %370
    %v372 = vsub.f32 %v367, %v371
    %v373 = vmul.f32 %v372, 1.442695
    %v374 = vpow.pop %v373
    %375 = vadd.xlane.f32.xlu0 %v374
    %v376 = vpop.xlane.xlu0 %375
    %v377 = vlog2.pop %v376
    %v378 = vmul.f32 %v377, 0.6931472
    %v379 = vadd.f32 %v371, %v378
    %v380 = vsub.f32 %v367, %v379
    %381 = vst [vmem:[#allocation8] sm:$0xff] %v380
    // Predicated region
    $region50: #{tpu_custom_call.1} parent=1 // pred_check
      _
    $region51: #{tpu_custom_call.1} parent=1 // pred_check_branch
      %383 = sbr.rel (0) target = $region53
    $region52: #{tpu_custom_call.1} parent=1 // pred_region
      %s385 = ssub.s32 128, 128
      %386 = vsyncadd [#allocation4], %s385
      %s388 = sshll.u32 [#allocation8], 4
      %s389 = int_to_ptr.vmem [resolvable:$true] %s388
      %391 = dma.vmem_to_hbm [thread:$0]  %s389, 128, %s9, [#allocation4]
    $region53: #{tpu_custom_call.1} parent=1 // pred_fallthru
      _
    // Predicated region
    $region54: #{tpu_custom_call.1} parent=1 // pred_check
      _
    $region55: #{tpu_custom_call.1} parent=1 // pred_check_branch
      %393 = sbr.rel (0) target = $region57
    $region56: #{tpu_custom_call.1} parent=1 // pred_region
      %394 = dma.done [#allocation4], 128
    $region57: #{tpu_custom_call.1} parent=1 // pred_fallthru
      _
    %395 = vsyncpa [#allocation3], 1
    %396 = vsyncpa [#allocation6], 1
    %397 = vsyncpa [#allocation4], 1

</llo_original>
